<compile_context>
chip_gen: v5e
topology: v5e:2x2
jax: 0.10.0
libtpu: 0.0.40
codegen_flags: <defaults>
</compile_context>

<pallas_src>
import jax
import jax.numpy as jnp
from jax.experimental import pallas as pl
from jax.experimental.pallas import tpu as pltpu


def _round_up(x, m):
    return (x + m - 1) // m * m


def _pick_batch_block(batch, per_batch_bytes, budget_bytes, target_bytes=1 << 20):
    """Pick how many batches to process per grid step.

    Smallest divisor of `batch` whose (double-buffered) block fits the VMEM
    budget and moves >= target_bytes per step, while keeping >= 2 grid steps
    whenever batch >= 2 (v7x megacore).
    """
    best = 1
    for nb in range(1, batch + 1):
        if batch % nb:
            continue
        if batch >= 2 and batch // nb < 2:
            continue                                  # keep >= 2 parallel steps
        if nb > 1 and 2 * nb * per_batch_bytes > budget_bytes:
            break                                     # double-buffered blocks no longer fit
        best = nb
        if nb * per_batch_bytes >= target_bytes:
            break                                     # per-step work already amortizes overhead
    return best


def predicted_projection(x, weight, bias, *, out_dtype=None):
    """out[b, p, c] = sum_s weight[p, s] * x[b, s, c] + bias[p].

    x: (B, S, C), weight: (P, S), bias: (P,) -> (B, P, C).
    Pass bf16 x/weight and/or out_dtype=jnp.bfloat16 for bandwidth savings;
    accumulation stays f32.
    """
    B, S, C = x.shape
    P, S_w = weight.shape
    assert S_w == S, "weight must be (pred_len, seq_len)"
    if out_dtype is None:
        out_dtype = x.dtype
    out_itemsize = jnp.dtype(out_dtype).itemsize

    # Bias pre-broadcast to (P, C) in f32: dense add in-kernel, loaded once.
    b_full = jnp.broadcast_to(bias.astype(jnp.float32).reshape(P, 1), (P, C))

    # ---- batch-block sizing (VMEM footprint uses padded vreg tiles) -------
    s_pad = _round_up(S, 8)
    p_pad = _round_up(P, 8)
    c_pad = _round_up(C, 128)
    per_batch_bytes = c_pad * (
        s_pad * jnp.dtype(x.dtype).itemsize + p_pad * out_itemsize
    )
    vmem_limit = 32 * 1024 * 1024
    resident_bytes = (
        p_pad * _round_up(S, 128) * jnp.dtype(weight.dtype).itemsize  # W (Buffered(1))
        + p_pad * c_pad * 4                                           # bias (Buffered(1))
    )
    block_budget = max(0, vmem_limit - resident_bytes - (4 << 20))
    nb = _pick_batch_block(B, per_batch_bytes, block_budget)

    # ---- advisory cost (W / bias counted once: they are resident) ---------
    cost = pl.CostEstimate(
        flops=2 * B * P * S * C,
        transcendentals=0,
        bytes_accessed=(
            x.size * jnp.dtype(x.dtype).itemsize
            + weight.size * jnp.dtype(weight.dtype).itemsize
            + P * C * 4
            + B * P * C * out_itemsize
        ),
    )

    def kernel(w_ref, b_ref, x_ref, o_ref):
        # w_ref: (P, S), b_ref: (P, C) f32, x_ref: (nb, S, C), o_ref: (nb, P, C)
        w = w_ref[...]
        b = b_ref[...]
        for i in range(nb):                       # static unroll over the batch block
            y = jnp.dot(w, x_ref[i], preferred_element_type=jnp.float32)  # MXU, f32 acc
            o_ref[i] = (y + b).astype(o_ref.dtype)

    return pl.pallas_call(
        kernel,
        out_shape=jax.ShapeDtypeStruct((B, P, C), out_dtype),
        grid_spec=pltpu.PrefetchScalarGridSpec(
            num_scalar_prefetch=0,
            grid=(B // nb,),
            in_specs=[
                # Grid-invariant operands: constant index_map, single VMEM buffer.
                pl.BlockSpec((P, S), lambda i: (0, 0),
                             pipeline_mode=pl.Buffered(1)),
                pl.BlockSpec((P, C), lambda i: (0, 0),
                             pipeline_mode=pl.Buffered(1)),
                # Natural-layout batch block of x.
                pl.BlockSpec((nb, S, C), lambda i: (i, 0, 0)),
            ],
            out_specs=pl.BlockSpec((nb, P, C), lambda i: (i, 0, 0)),
        ),
        compiler_params=pltpu.CompilerParams(
            dimension_semantics=("parallel",),     # batch blocks split across TCs
            vmem_limit_bytes=vmem_limit,
        ),
        cost_estimate=cost,
    )(weight, b_full, x)


if __name__ == "__main__":
    key = jax.random.PRNGKey(0)
    k1, k2 = jax.random.split(key)

    def make_case(k, B, S, P, C):
        kx, kw, kb = jax.random.split(k, 3)
        x = jax.random.normal(kx, (B, S, C), dtype=jnp.float32)
        # Deterministic "PyTorch-like" Linear init: U(-1/sqrt(S), 1/sqrt(S))
        bound = 1.0 / (S ** 0.5)
        w = jax.random.uniform(kw, (P, S), minval=-bound, maxval=bound,
                               dtype=jnp.float32)
        b = jax.random.uniform(kb, (P,), minval=-bound, maxval=bound,
                               dtype=jnp.float32)
        return x, w, b

    # Case 1: small module-like shapes (batch=2, seq_len=8, pred_len=12, channels=4).
    # Case 2: lane-dense channel count (C=128) exercising nb>1 batch blocking.
    cases = [(k1, (2, 8, 12, 4)), (k2, (4, 16, 24, 128))]
    for k, (B, S, P, C) in cases:
        x, w, b = make_case(k, B, S, P, C)
        out = jax.block_until_ready(predicted_projection(x, w, b))
        ref = jnp.einsum("ps,bsc->bpc", w, x) + b[None, :, None]
        assert out.shape == (B, P, C)
        assert jnp.allclose(out, ref, atol=1e-5, rtol=1e-5)

    print("KERNEL_OK")
</pallas_src>

<mosaic_0001>
module attributes {stable_mosaic.version = 11 : i64} {
  func.func @kernel(%arg0: i32, %arg1: memref<12x8xf32, #tpu.memory_space<vmem>>, %arg2: memref<12x4xf32, #tpu.memory_space<vmem>>, %arg3: memref<1x8x4xf32, #tpu.memory_space<vmem>>, %arg4: memref<1x12x4xf32, #tpu.memory_space<vmem>>) attributes {dimension_semantics = [#tpu.dimension_semantics<parallel>], iteration_bounds = array<i64: 2>, scalar_prefetch = 0 : i64, scratch_operands = 0 : i64, tpu.core_type = #tpu.core_type<tc>, window_params = [{pipeline_mode = #tpu.pipeline_mode<synchronous>, transform_indices = @transform_0, window_bounds = array<i64: 12, 8>}, {pipeline_mode = #tpu.pipeline_mode<synchronous>, transform_indices = @transform_1, window_bounds = array<i64: 12, 4>}, {transform_indices = @transform_2, window_bounds = array<i64: 1, 8, 4>}, {transform_indices = @transform_3, window_bounds = array<i64: 1, 12, 4>}]} {
    %c0 = arith.constant 0 : index
    %c0_0 = arith.constant 0 : index
    %0 = vector.load %arg1[%c0, %c0_0] : memref<12x8xf32, #tpu.memory_space<vmem>>, vector<12x8xf32>
    %c0_1 = arith.constant 0 : index
    %c0_2 = arith.constant 0 : index
    %1 = vector.load %arg2[%c0_1, %c0_2] : memref<12x4xf32, #tpu.memory_space<vmem>>, vector<12x4xf32>
    %c0_3 = arith.constant 0 : index
    %c0_4 = arith.constant 0 : index
    %c0_5 = arith.constant 0 : index
    %2 = vector.load %arg3[%c0_3, %c0_4, %c0_5] : memref<1x8x4xf32, #tpu.memory_space<vmem>>, vector<1x8x4xf32>
    %3 = vector.shape_cast %2 : vector<1x8x4xf32> to vector<8x4xf32>
    %cst = arith.constant dense<0.000000e+00> : vector<12x4xf32>
    %4 = tpu.matmul %0, %3, %cst {dimension_numbers = #tpu.dot_dimension_numbers<[1], [0], [0], [1], [0, 0, 1, 1], [], []>} : vector<12x8xf32>, vector<8x4xf32>, vector<12x4xf32> -> vector<12x4xf32>
    %5 = arith.addf %4, %1 : vector<12x4xf32>
    %c0_6 = arith.constant 0 : index
    %c0_7 = arith.constant 0 : index
    %c0_8 = arith.constant 0 : index
    %6 = vector.load %arg4[%c0_6, %c0_7, %c0_8] : memref<1x12x4xf32, #tpu.memory_space<vmem>>, vector<1x12x4xf32>
    %7 = vector.shape_cast %6 : vector<1x12x4xf32> to vector<12x4xf32>
    %8 = vector.shape_cast %5 : vector<12x4xf32> to vector<1x12x4xf32>
    tpu.vector_store %arg4[%c0_6, %c0_7, %c0_8], %8 {strides = array<i32>} : memref<1x12x4xf32, #tpu.memory_space<vmem>>, vector<1x12x4xf32>,
    return
  }
  func.func @transform_0(%arg0: i32) -> (i32, i32) {
    %c0_i32 = arith.constant 0 : i32
    %c0_i32_0 = arith.constant 0 : i32
    %c0_i32_1 = arith.constant 0 : i32
    return %c0_i32, %c0_i32_0 : i32, i32
  }
  func.func @transform_1(%arg0: i32) -> (i32, i32) {
    %c0_i32 = arith.constant 0 : i32
    %c0_i32_0 = arith.constant 0 : i32
    %c0_i32_1 = arith.constant 0 : i32
    return %c0_i32, %c0_i32_0 : i32, i32
  }
  func.func @transform_2(%arg0: i32) -> (i32, i32, i32) {
    %c0_i32 = arith.constant 0 : i32
    %c0_i32_0 = arith.constant 0 : i32
    %c0_i32_1 = arith.constant 0 : i32
    return %arg0, %c0_i32, %c0_i32_0 : i32, i32, i32
  }
  func.func @transform_3(%arg0: i32) -> (i32, i32, i32) {
    %c0_i32 = arith.constant 0 : i32
    %c0_i32_0 = arith.constant 0 : i32
    %c0_i32_1 = arith.constant 0 : i32
    return %arg0, %c0_i32, %c0_i32_0 : i32, i32, i32
  }
}

</mosaic_0001>

<llo_original>
// kernel: tpu_custom_call.1
$region0: #{tpu_custom_call.1}
  #allocation0 [shape = 'u32[]', space=smem, size = 0x4, offset = 0x4, fixed_abs, tag = 'smem constant byte address 0x4 - core index']
  #allocation1 [shape = 'u32[72,128]{1,0:T(1,128)}', space=vmem, size = 0x9000, scoped, tag = 'internal scratch']
  %s0 = inlined_call_operand.vmem [shape: f32[12,8], index: 0, kind: input, shape index: {}]
  %s1 = inlined_call_operand.vmem [shape: f32[12,4], index: 1, kind: input, shape index: {}]
  %s2 = inlined_call_operand.vmem [shape: f32[2,8,4], index: 2, kind: input, shape index: {}]
  %s3 = inlined_call_operand.vmem [shape: f32[2,12,4], index: 3, kind: output, shape index: {}]
  %s4 = sld [smem:[#allocation0]]
  $region45: #{tpu_custom_call.1} parent=0
    _
  %s6 = ssub.s32 1, %s4
  %s7 = scalar_select 0, %s6, %s4
  loop: start=0, step=1, limit=4
  $region2: #{tpu_custom_call.1} parent=0 // loop_pre_header
    _
  $region3: #{tpu_custom_call.1} parent=0 // loop_header
    %s9 = sphi 0, %s13
    %p10 = scmp.ge.s32.totalorder %s9, 4
    %s17 = sphi 0, %s17
    %s19 = sphi 0, %s17
    %s20 = sphi 0, %s19
    %s34 = sphi 0, %s20
    %s38 = sphi 0, %s38
    %s40 = sphi 0, %s38
    %s41 = sphi 0, %s40
    %s55 = sphi 0, %s41
    %s61 = sphi 0, %s63
    %s64 = sphi 0, %s61
    %s65 = sphi 0, %s64
    %s81 = sphi 0, %s65
    %s87 = sphi 0, %s89
    %s90 = sphi 0, %s87
    %s91 = sphi 0, %s90
    %s107 = sphi 0, %s91
  $region4: #{tpu_custom_call.1} parent=0 // loop_header_branch
    %12 = sbr.rel (%p10) target = $region8
  $region5: #{tpu_custom_call.1} parent=0 // loop_body
    %s14 = ssub.s32 %s9, 1
    %s15 = ssub.s32 %s9, 2
    %s16 = sadd.s32 %s9, 1
    %s18 = sadd.s32 %s17, 1
    %p21 = scmp.eq.s32.totalorder %s9, 1
    %p22 = scmp.ne.s32.totalorder %s17, %s19
    %p23 = scmp.eq.s32.totalorder %s9, 0
    %p24 = por %p22, %p23
    %p25 = scmp.ne.s32.totalorder %s17, %s19
    %p26 = scmp.eq.s32.totalorder %s14, 1
    %p27 = por %p25, %p26
    %p28 = scmp.ne.s32.totalorder %s19, %s20
    %p29 = scmp.eq.s32.totalorder %s14, 0
    %p30 = por %p28, %p29
    %p31 = scmp.ne.s32.totalorder %s19, %s20
    %p32 = scmp.eq.s32.totalorder %s15, 1
    %p33 = por %p31, %p32
    %p35 = scmp.ne.s32.totalorder %s20, %s34
    %p36 = scmp.eq.s32.totalorder %s15, 0
    %p37 = por %p35, %p36
    %s39 = sadd.s32 %s38, 1
    %p42 = scmp.eq.s32.totalorder %s9, 1
    %p43 = scmp.ne.s32.totalorder %s38, %s40
    %p44 = scmp.eq.s32.totalorder %s9, 0
    %p45 = por %p43, %p44
    %p46 = scmp.ne.s32.totalorder %s38, %s40
    %p47 = scmp.eq.s32.totalorder %s14, 1
    %p48 = por %p46, %p47
    %p49 = scmp.ne.s32.totalorder %s40, %s41
    %p50 = scmp.eq.s32.totalorder %s14, 0
    %p51 = por %p49, %p50
    %p52 = scmp.ne.s32.totalorder %s40, %s41
    %p53 = scmp.eq.s32.totalorder %s15, 1
    %p54 = por %p52, %p53
    %p56 = scmp.ne.s32.totalorder %s41, %s55
    %p57 = scmp.eq.s32.totalorder %s15, 0
    %p58 = por %p56, %p57
    %s59 = ssub.s32 %s9, %s16
    %p60 = scmp.eq.s32.totalorder %s59, 0
    %s62 = sadd.s32 %s61, 1
    %s63 = scalar_select %p60, %s61, %s62
    %p66 = pneg %p60
    %p67 = scmp.eq.s32.totalorder %s9, 1
    %p68 = por %p66, %p67
    %p69 = scmp.ne.s32.totalorder %s61, %s64
    %p70 = scmp.eq.s32.totalorder %s9, 0
    %p71 = por %p69, %p70
    %p72 = scmp.ne.s32.totalorder %s61, %s64
    %p73 = scmp.eq.s32.totalorder %s14, 1
    %p74 = por %p72, %p73
    %p75 = scmp.ne.s32.totalorder %s64, %s65
    %p76 = scmp.eq.s32.totalorder %s14, 0
    %p77 = por %p75, %p76
    %p78 = scmp.ne.s32.totalorder %s64, %s65
    %p79 = scmp.eq.s32.totalorder %s15, 1
    %p80 = por %p78, %p79
    %p82 = scmp.ne.s32.totalorder %s65, %s81
    %p83 = scmp.eq.s32.totalorder %s15, 0
    %p84 = por %p82, %p83
    %s85 = ssub.s32 %s9, %s16
    %p86 = scmp.eq.s32.totalorder %s85, 0
    %s88 = sadd.s32 %s87, 1
    %s89 = scalar_select %p86, %s87, %s88
    %p92 = pneg %p86
    %p93 = scmp.eq.s32.totalorder %s9, 1
    %p94 = por %p92, %p93
    %p95 = scmp.ne.s32.totalorder %s87, %s90
    %p96 = scmp.eq.s32.totalorder %s9, 0
    %p97 = por %p95, %p96
    %p98 = scmp.ne.s32.totalorder %s87, %s90
    %p99 = scmp.eq.s32.totalorder %s14, 1
    %p100 = por %p98, %p99
    %p101 = scmp.ne.s32.totalorder %s90, %s91
    %p102 = scmp.eq.s32.totalorder %s14, 0
    %p103 = por %p101, %p102
    %p104 = scmp.ne.s32.totalorder %s90, %s91
    %p105 = scmp.eq.s32.totalorder %s15, 1
    %p106 = por %p104, %p105
    %p108 = scmp.ne.s32.totalorder %s91, %s107
    %p109 = scmp.eq.s32.totalorder %s15, 0
    %p110 = por %p108, %p109
    %p111 = scmp.le.s32.totalorder 1, %s9
    %p112 = scmp.lt.s32.totalorder %s9, 3
    %p113 = pnand %p111, %p112
    %p114 = pneg %p113
    // Predicated region
    $region9: #{tpu_custom_call.1} parent=5 // pred_check
      _
    $region10: #{tpu_custom_call.1} parent=5 // pred_check_branch
      %116 = sbr.rel (%p113) target = $region12
    $region11: #{tpu_custom_call.1} parent=5 // pred_region
      %s117 = ssub.s32 %s9, 1
      // Predicated region
      $region13: #{tpu_custom_call.1} parent=11 // pred_check
        %p118 = pneg %p30
      $region14: #{tpu_custom_call.1} parent=11 // pred_check_branch
        %120 = sbr.rel (%p118) target = $region16
      $region15: #{tpu_custom_call.1} parent=11 // pred_region
        _
      $region16: #{tpu_custom_call.1} parent=11 // pred_fallthru
        _
      // Predicated region
      $region17: #{tpu_custom_call.1} parent=11 // pred_check
        %p121 = pneg %p51
      $region18: #{tpu_custom_call.1} parent=11 // pred_check_branch
        %123 = sbr.rel (%p121) target = $region20
      $region19: #{tpu_custom_call.1} parent=11 // pred_region
        _
      $region20: #{tpu_custom_call.1} parent=11 // pred_fallthru
        _
    $region12: #{tpu_custom_call.1} parent=5 // pred_fallthru
      _
    %p124 = scmp.lt.s32.totalorder %s9, 2
    // Predicated region
    $region21: #{tpu_custom_call.1} parent=5 // pred_check
      %p125 = pneg %p124
    $region22: #{tpu_custom_call.1} parent=5 // pred_check_branch
      %127 = sbr.rel (%p125) target = $region24
    $region23: #{tpu_custom_call.1} parent=5 // pred_region
      // Predicated region
      $region25: #{tpu_custom_call.1} parent=23 // pred_check
        %p128 = pneg %p71
      $region26: #{tpu_custom_call.1} parent=23 // pred_check_branch
        %130 = sbr.rel (%p128) target = $region28
      $region27: #{tpu_custom_call.1} parent=23 // pred_region
        %p131 = scmp.lt.s32.totalorder %s9, 1
        %s132 = scalar_select %p131, %s9, 1
        %s133 = smul.addr %s132, 8
        %s134 = scalar_lea.vmem %s2, %s133
      $region28: #{tpu_custom_call.1} parent=23 // pred_fallthru
        _
    $region24: #{tpu_custom_call.1} parent=5 // pred_fallthru
      _
    %p135 = scmp.le.s32.totalorder 1, %s9
    %p136 = scmp.lt.s32.totalorder %s9, 3
    %p137 = pnand %p135, %p136
    %p138 = pneg %p137
    // Predicated region
    $region29: #{tpu_custom_call.1} parent=5 // pred_check
      _
    $region30: #{tpu_custom_call.1} parent=5 // pred_check_branch
      %140 = sbr.rel (%p137) target = $region32
    $region31: #{tpu_custom_call.1} parent=5 // pred_region
      %s141 = ssub.s32 %s9, 1
      %p142 = pneg %p30
      %p143 = pneg %p27
      %p144 = pneg %p51
      %p145 = pneg %p48
      %p146 = scmp.lt.s32.totalorder %s14, 1
      %s147 = scalar_select %p146, %s14, 1
      %s148 = smul.addr %s147, 8
      %s149 = scalar_lea.vmem %s2, %s148
      %p150 = pneg %p77
      %p151 = pneg %p74
      %p152 = pneg %p103
      %p153 = pneg %p100
      %p154 = scmp.lt.s32.totalorder %s14, 1
      %s155 = scalar_select %p154, %s14, 1
      %s156 = smul.addr %s155, 2
      %s157 = smul.addr %s156, 8
      %s158 = scalar_lea.vmem %s3, %s157
      %p159 = scmp.lt.s32.totalorder %s14, 1
      %s160 = scalar_select %p159, %s14, 1
      %s161 = smul.addr %s160, 8
      %s162 = scalar_lea.vmem %s2, %s161
      %p163 = scmp.lt.s32.totalorder %s14, 1
      %s164 = scalar_select %p163, %s14, 1
      %s165 = smul.addr %s164, 2
      %s166 = smul.addr %s165, 8
      %s167 = scalar_lea.vmem %s3, %s166
      %v168 = vld [vmem:[%s0] sm:$0xff]
      %v169 = vld [vmem:[%s0 + $0x8] sm:$0xf]
      %v170 = vld [vmem:[%s1] sm:$0xff]
      %v171 = vld [vmem:[%s1 + $0x8] sm:$0xf]
      %v172 = vld [vmem:[%s162] sm:$0xff]
      %vm173 = vcmask 64512
      %v175 = vsel %vm173, %v168, 0
      %v178 = vsel %vm173, %v169, 0
      %180 = vmatpush.msra.mxu0 0.0
      %181 = vmatpush.msra.mxu0 0.0
      %182 = vmatpush.msra.mxu0 0.0
      %183 = vmatpush.msra.mxu0 0.0
      %184 = vmatpush.msra.mxu0 0.0
      %185 = vmatpush.msra.mxu0 0.0
      %186 = vmatpush.msra.mxu0 0.0
      %187 = vmatpush.msra.mxu0 0.0
      %188 = vmatpush.msra.mxu0 0.0
      %189 = vmatpush.msra.mxu0 0.0
      %190 = vmatpush.msra.mxu0 0.0
      %191 = vmatpush.msra.mxu0 0.0
      %192 = vmatpush.msra.mxu0 0.0
      %193 = vmatpush.msra.mxu0 0.0
      %194 = vmatpush.msra.mxu0 0.0
      %195 = vmatpush.msra.mxu0 %v172
      %196 = vmatmul.f32.gmra.mxu0 %v175
      %v197 = vpop.f32.mrf.mxu0
      %v198 = vadd.f32 %v170, %v197
      %199 = vmatmul.f32.gmra.mxu0 %v178
      %v200 = vpop.f32.mrf.mxu0
      %v201 = vadd.f32 %v171, %v200
      %202 = vdwg.mxu0
      %vm203 = vcmask 31744
      %204 = vst.msk [vmem:[%s167] sm:$0xff] %vm203, %v198
      %vm205 = vcmask 27648
      %206 = vst.msk [vmem:[%s167 + $0x8] sm:$0xf] %vm205, %v201
      %p207 = scmp.lt.s32.totalorder %s14, 1
      %s208 = scalar_select %p207, %s14, 1
      %s209 = smul.addr %s208, 2
      %s210 = smul.addr %s209, 8
      %s211 = scalar_lea.vmem %s3, %s210
      // Predicated region
      $region33: #{tpu_custom_call.1} parent=31 // pred_check
        %p212 = pneg %p100
      $region34: #{tpu_custom_call.1} parent=31 // pred_check_branch
        %214 = sbr.rel (%p212) target = $region36
      $region35: #{tpu_custom_call.1} parent=31 // pred_region
        _
      $region36: #{tpu_custom_call.1} parent=31 // pred_fallthru
        _
    $region32: #{tpu_custom_call.1} parent=5 // pred_fallthru
      _
    %p215 = scmp.le.s32.totalorder 2, %s9
    // Predicated region
    $region37: #{tpu_custom_call.1} parent=5 // pred_check
      %p216 = pneg %p215
    $region38: #{tpu_custom_call.1} parent=5 // pred_check_branch
      %218 = sbr.rel (%p216) target = $region40
    $region39: #{tpu_custom_call.1} parent=5 // pred_region
      %s219 = ssub.s32 %s9, 2
      // Predicated region
      $region41: #{tpu_custom_call.1} parent=39 // pred_check
        %p220 = pneg %p106
      $region42: #{tpu_custom_call.1} parent=39 // pred_check_branch
        %222 = sbr.rel (%p220) target = $region44
      $region43: #{tpu_custom_call.1} parent=39 // pred_region
        %p223 = scmp.lt.s32.totalorder %s15, 1
        %s224 = scalar_select %p223, %s15, 1
        %s225 = smul.addr %s224, 2
        %s226 = smul.addr %s225, 8
        %s227 = scalar_lea.vmem %s3, %s226
      $region44: #{tpu_custom_call.1} parent=39 // pred_fallthru
        _
    $region40: #{tpu_custom_call.1} parent=5 // pred_fallthru
      _
  $region6: #{tpu_custom_call.1} parent=0 // loop_footer
    %s13 = sadd.s32 1, %s9
  $region7: #{tpu_custom_call.1} parent=0 // loop_footer_branch
    %8 = sbr.rel target = $region3
  $region8: #{tpu_custom_call.1} parent=0 // loop_exit
    _

</llo_original>
